<compile_context>
chip_gen: v7x
topology: tpu7x:2x2x1
jax: 0.10.0
libtpu: 0.0.40
codegen_flags: <defaults>
</compile_context>

<pallas_src>
import math
import jax
import jax.numpy as jnp
from jax.experimental import pallas as pl
from jax.experimental.pallas import tpu as pltpu

_INV_SQRT2 = 1.0 / math.sqrt(2.0)


def _round_up(x, m):
    return (x + m - 1) // m * m


def _mlp_kernel(x_ref, w1_ref, b1_ref, w2_ref, b2_ref, o_ref, acc_ref):
    h_idx = pl.program_id(1)
    n_h = pl.num_programs(1)

    # dense1 partial over one hidden tile (full contraction over in_features).
    # Native-dtype operands into the MXU (bf16 fast path), f32 accumulation.
    h = jnp.dot(x_ref[...], w1_ref[...], preferred_element_type=jnp.float32)
    h = h + b1_ref[...].astype(jnp.float32)

    # exact (erf) GELU -- PyTorch nn.GELU default -- computed in f32 (EUP).
    h = 0.5 * h * (1.0 + jax.lax.erf(h * _INV_SQRT2))

    # dropout (eval mode) -> identity

    # dense2 partial: cast activations to the weight dtype for full MXU rate.
    partial = jnp.dot(h.astype(w2_ref.dtype), w2_ref[...],
                      preferred_element_type=jnp.float32)

    @pl.when(h_idx == 0)
    def _first():
        acc_ref[...] = partial            # direct store: no zero-init + RMW on step 0

    @pl.when(h_idx > 0)
    def _accum():
        acc_ref[...] += partial

    # dropout (eval mode) -> identity

    @pl.when(h_idx == n_h - 1)
    def _finalize():
        o_ref[...] = (acc_ref[...] + b2_ref[...].astype(jnp.float32)).astype(o_ref.dtype)


def mlp_forward(x, w1, b1, w2, b2, *, row_tile=256, h_tile=512):
    """x: [..., in_features]; w1: [in, hid]; b1: [1, hid]; w2: [hid, out]; b2: [1, out]."""
    in_f = x.shape[-1]
    hid_f = w1.shape[1]
    out_f = w2.shape[1]
    lead_shape = x.shape[:-1]

    x2d = x.reshape(-1, in_f)
    rows = x2d.shape[0]

    # ---- row tiling: clamp tile for small inputs, pad rows to a tile multiple ----
    rt = min(row_tile, _round_up(rows, 8))
    rows_p = _round_up(rows, rt)
    if rows_p != rows:
        x2d = jnp.pad(x2d, ((0, rows_p - rows), (0, 0)))

    # ---- hidden tiling: full hidden if it fits one tile, else 128-multiple tiles ----
    if hid_f <= h_tile:
        ht = hid_f
        hid_p = hid_f
    else:
        ht = max(128, (min(h_tile, hid_f) // 128) * 128)  # 128-lane multiple
        hid_p = _round_up(hid_f, ht)
    if hid_p != hid_f:
        # zero-padded hidden columns are exact no-ops: gelu(0)=0 and the matching
        # W2 rows are zero, so they contribute nothing to the output.
        w1 = jnp.pad(w1, ((0, 0), (0, hid_p - hid_f)))
        b1 = jnp.pad(b1, ((0, 0), (0, hid_p - hid_f)))
        w2 = jnp.pad(w2, ((0, hid_p - hid_f), (0, 0)))

    # ---- output padding to a 128-lane multiple: unmasked lane-dense stores ----
    out_fp = _round_up(out_f, 128)
    if out_fp != out_f:
        # zero W2 columns / zero b2 -> padded output columns are exact zeros.
        w2 = jnp.pad(w2, ((0, 0), (0, out_fp - out_f)))
        b2 = jnp.pad(b2, ((0, 0), (0, out_fp - out_f)))

    grid = (rows_p // rt, hid_p // ht)

    # ---- VMEM budget (double-buffered inputs/outputs + f32 accumulator) ----
    def nbytes(n_elems, dt):
        return n_elems * jnp.dtype(dt).itemsize

    est = (2 * (nbytes(rt * in_f, x2d.dtype)
                + nbytes(in_f * ht, w1.dtype)
                + nbytes(ht, b1.dtype)
                + nbytes(ht * out_fp, w2.dtype)
                + nbytes(rt * out_fp, x.dtype))
           + nbytes(out_fp, b2.dtype)
           + rt * out_fp * 4)
    vmem_limit = int(min(max(2 * est, 32 * 1024 * 1024), 64 * 1024 * 1024))

    cost = pl.CostEstimate(
        flops=2 * rows_p * in_f * hid_p + 2 * rows_p * hid_p * out_fp,
        transcendentals=rows_p * hid_p,
        bytes_accessed=(nbytes(rows_p * in_f, x2d.dtype)
                        + nbytes(in_f * hid_p, w1.dtype)
                        + nbytes(hid_p, b1.dtype)
                        + nbytes(hid_p * out_fp, w2.dtype)
                        + nbytes(out_fp, b2.dtype)
                        + nbytes(rows_p * out_fp, x.dtype)),
    )

    out2d = pl.pallas_call(
        _mlp_kernel,
        out_shape=jax.ShapeDtypeStruct((rows_p, out_fp), x.dtype),
        grid_spec=pltpu.PrefetchScalarGridSpec(
            num_scalar_prefetch=0,
            grid=grid,
            in_specs=[
                pl.BlockSpec((rt, in_f), lambda i, h: (i, 0)),    # x row tile (resident across h)
                pl.BlockSpec((in_f, ht), lambda i, h: (0, h)),    # W1 hidden-column tile
                pl.BlockSpec((1, ht), lambda i, h: (0, h)),       # b1 hidden tile
                pl.BlockSpec((ht, out_fp), lambda i, h: (h, 0)),  # W2 hidden-row tile
                pl.BlockSpec((1, out_fp), lambda i, h: (0, 0)),   # b2 (constant, tiny)
            ],
            out_specs=pl.BlockSpec((rt, out_fp), lambda i, h: (i, 0)),
            scratch_shapes=[pltpu.VMEM((rt, out_fp), jnp.float32)],  # f32 accumulator
        ),
        compiler_params=pltpu.CompilerParams(
            dimension_semantics=("parallel", "arbitrary"),
            vmem_limit_bytes=vmem_limit,
        ),
        cost_estimate=cost,
    )(x2d, w1, b1, w2, b2)

    return out2d[:rows, :out_f].reshape(*lead_shape, out_f)


def init_mlp_params(key, in_features, hidden_features, out_features, dtype=jnp.float32):
    """Deterministic init mirroring nn.Linear's uniform bounds.

    Weights are stored transposed relative to torch ([in, out]) so the kernel does x @ W.
    """
    k1, k2, k3, k4 = jax.random.split(key, 4)
    bound1 = 1.0 / math.sqrt(in_features)
    bound2 = 1.0 / math.sqrt(hidden_features)
    w1 = jax.random.uniform(k1, (in_features, hidden_features), dtype, -bound1, bound1)
    b1 = jax.random.uniform(k2, (1, hidden_features), dtype, -bound1, bound1)
    w2 = jax.random.uniform(k3, (hidden_features, out_features), dtype, -bound2, bound2)
    b2 = jax.random.uniform(k4, (1, out_features), dtype, -bound2, bound2)
    return w1, b1, w2, b2


def reference_mlp(x2d, w1, b1, w2, b2):
    h = x2d @ w1 + b1
    h = 0.5 * h * (1.0 + jax.lax.erf(h * _INV_SQRT2))
    return h @ w2 + b2


if __name__ == "__main__":
    # Small, lane-dense shapes consistent with the module (rows = batch*seq tokens).
    batch, seq = 4, 7                                   # 28 rows -> exercises row padding
    in_features, hidden_features, out_features = 128, 384, 96  # out 96 -> exercises lane padding

    key = jax.random.PRNGKey(0)
    kx, kp = jax.random.split(key)

    x = jax.random.normal(kx, (batch, seq, in_features), jnp.float32)
    w1, b1, w2, b2 = init_mlp_params(kp, in_features, hidden_features, out_features)

    # f32 path (bit-for-bit semantics of the PyTorch module in eval mode);
    # h_tile=128 forces 3 hidden tiles so the accumulator path is exercised.
    out = mlp_forward(x, w1, b1, w2, b2, row_tile=256, h_tile=128)
    jax.block_until_ready(out)

    ref2d = reference_mlp(x.reshape(-1, in_features), w1, b1, w2, b2)
    ref = ref2d.reshape(batch, seq, out_features)
    assert out.shape == (batch, seq, out_features)
    assert jnp.allclose(out, ref, atol=1e-5, rtol=1e-5), "f32 mismatch vs reference"

    # Single-hidden-tile path (no accumulation across grid steps).
    out_single = mlp_forward(x, w1, b1, w2, b2, row_tile=256, h_tile=512)
    jax.block_until_ready(out_single)
    assert jnp.allclose(out_single, ref, atol=1e-5, rtol=1e-5), "single-tile mismatch"

    # bf16 fast path: bf16 operands straight into the MXU, f32 accumulation in-kernel.
    xb = x.astype(jnp.bfloat16)
    w1b, b1b, w2b, b2b = (p.astype(jnp.bfloat16) for p in (w1, b1, w2, b2))
    out_bf16 = mlp_forward(xb, w1b, b1b, w2b, b2b, row_tile=256, h_tile=128)
    jax.block_until_ready(out_bf16)
    assert jnp.allclose(out_bf16.astype(jnp.float32), ref, atol=0.1, rtol=0.1), \
        "bf16 mismatch vs reference"

    print("KERNEL_OK")
</pallas_src>

<mosaic_0001>
module attributes {stable_mosaic.version = 11 : i64} {
  func.func @_mlp_kernel(%arg0: i32, %arg1: i32, %arg2: memref<32x128xf32, #tpu.memory_space<vmem>>, %arg3: memref<128x128xf32, #tpu.memory_space<vmem>>, %arg4: memref<1x128xf32, #tpu.memory_space<vmem>>, %arg5: memref<128x128xf32, #tpu.memory_space<vmem>>, %arg6: memref<1x128xf32, #tpu.memory_space<vmem>>, %arg7: memref<32x128xf32, #tpu.memory_space<vmem>>, %arg8: memref<32x128xf32, #tpu.memory_space<vmem>>) attributes {dimension_semantics = [#tpu.dimension_semantics<parallel>, #tpu.dimension_semantics<arbitrary>], iteration_bounds = array<i64: 1, 3>, scalar_prefetch = 0 : i64, scratch_operands = 1 : i64, tpu.core_type = #tpu.core_type<tc>, window_params = [{transform_indices = @transform_0, window_bounds = array<i64: 32, 128>}, {transform_indices = @transform_1, window_bounds = array<i64: 128, 128>}, {transform_indices = @transform_2, window_bounds = array<i64: 1, 128>}, {transform_indices = @transform_3, window_bounds = array<i64: 128, 128>}, {pipeline_mode = #tpu.pipeline_mode<synchronous>, transform_indices = @transform_4, window_bounds = array<i64: 1, 128>}, {transform_indices = @transform_5, window_bounds = array<i64: 32, 128>}]} {
    %c0 = arith.constant 0 : index
    %c0_0 = arith.constant 0 : index
    %0 = vector.load %arg2[%c0, %c0_0] : memref<32x128xf32, #tpu.memory_space<vmem>>, vector<32x128xf32>
    %c0_1 = arith.constant 0 : index
    %c0_2 = arith.constant 0 : index
    %1 = vector.load %arg3[%c0_1, %c0_2] : memref<128x128xf32, #tpu.memory_space<vmem>>, vector<128x128xf32>
    %cst = arith.constant dense<0.000000e+00> : vector<32x128xf32>
    %2 = tpu.matmul %0, %1, %cst {dimension_numbers = #tpu.dot_dimension_numbers<[1], [0], [0], [1], [0, 0, 1, 1], [], []>} : vector<32x128xf32>, vector<128x128xf32>, vector<32x128xf32> -> vector<32x128xf32>
    %c0_3 = arith.constant 0 : index
    %c0_4 = arith.constant 0 : index
    %3 = vector.load %arg4[%c0_3, %c0_4] : memref<1x128xf32, #tpu.memory_space<vmem>>, vector<1x128xf32>
    %4 = vector.broadcast %3 : vector<1x128xf32> to vector<32x128xf32>
    %5 = arith.addf %2, %4 : vector<32x128xf32>
    %cst_5 = arith.constant 5.000000e-01 : f32
    %6 = vector.broadcast %cst_5 : f32 to vector<32x128xf32>
    %7 = arith.mulf %6, %5 : vector<32x128xf32>
    %cst_6 = arith.constant 0.707106769 : f32
    %8 = vector.broadcast %cst_6 : f32 to vector<32x128xf32>
    %9 = arith.mulf %5, %8 : vector<32x128xf32>
    %10 = math.erf %9 : vector<32x128xf32>
    %cst_7 = arith.constant 1.000000e+00 : f32
    %11 = vector.broadcast %cst_7 : f32 to vector<32x128xf32>
    %12 = arith.addf %11, %10 : vector<32x128xf32>
    %13 = arith.mulf %7, %12 : vector<32x128xf32>
    %c0_8 = arith.constant 0 : index
    %c0_9 = arith.constant 0 : index
    %14 = vector.load %arg5[%c0_8, %c0_9] : memref<128x128xf32, #tpu.memory_space<vmem>>, vector<128x128xf32>
    %cst_10 = arith.constant dense<0.000000e+00> : vector<32x128xf32>
    %15 = tpu.matmul %13, %14, %cst_10 {dimension_numbers = #tpu.dot_dimension_numbers<[1], [0], [0], [1], [0, 0, 1, 1], [], []>} : vector<32x128xf32>, vector<128x128xf32>, vector<32x128xf32> -> vector<32x128xf32>
    %c0_i32 = arith.constant 0 : i32
    %16 = arith.cmpi eq, %arg1, %c0_i32 : i32
    %17 = arith.extui %16 : i1 to i32
    %c0_i32_11 = arith.constant 0 : i32
    %18 = arith.cmpi ne, %17, %c0_i32_11 : i32
    scf.if %18 {
      %c0_15 = arith.constant 0 : index
      %c0_16 = arith.constant 0 : index
      %25 = vector.load %arg8[%c0_15, %c0_16] : memref<32x128xf32, #tpu.memory_space<vmem>>, vector<32x128xf32>
      tpu.vector_store %arg8[%c0_15, %c0_16], %15 {strides = array<i32>} : memref<32x128xf32, #tpu.memory_space<vmem>>, vector<32x128xf32>,
    } else {
    }
    %c0_i32_12 = arith.constant 0 : i32
    %19 = arith.cmpi sgt, %arg1, %c0_i32_12 : i32
    %20 = arith.extui %19 : i1 to i32
    %c0_i32_13 = arith.constant 0 : i32
    %21 = arith.cmpi ne, %20, %c0_i32_13 : i32
    scf.if %21 {
      %c0_15 = arith.constant 0 : index
      %c0_16 = arith.constant 0 : index
      %25 = vector.load %arg8[%c0_15, %c0_16] : memref<32x128xf32, #tpu.memory_space<vmem>>, vector<32x128xf32>
      %26 = arith.addf %25, %15 : vector<32x128xf32>
      %c0_17 = arith.constant 0 : index
      %c0_18 = arith.constant 0 : index
      %27 = vector.load %arg8[%c0_17, %c0_18] : memref<32x128xf32, #tpu.memory_space<vmem>>, vector<32x128xf32>
      tpu.vector_store %arg8[%c0_17, %c0_18], %26 {strides = array<i32>} : memref<32x128xf32, #tpu.memory_space<vmem>>, vector<32x128xf32>,
    } else {
    }
    %c2_i32 = arith.constant 2 : i32
    %22 = arith.cmpi eq, %arg1, %c2_i32 : i32
    %23 = arith.extui %22 : i1 to i32
    %c0_i32_14 = arith.constant 0 : i32
    %24 = arith.cmpi ne, %23, %c0_i32_14 : i32
    scf.if %24 {
      %c0_15 = arith.constant 0 : index
      %c0_16 = arith.constant 0 : index
      %25 = vector.load %arg8[%c0_15, %c0_16] : memref<32x128xf32, #tpu.memory_space<vmem>>, vector<32x128xf32>
      %c0_17 = arith.constant 0 : index
      %c0_18 = arith.constant 0 : index
      %26 = vector.load %arg6[%c0_17, %c0_18] : memref<1x128xf32, #tpu.memory_space<vmem>>, vector<1x128xf32>
      %27 = vector.broadcast %26 : vector<1x128xf32> to vector<32x128xf32>
      %28 = arith.addf %25, %27 : vector<32x128xf32>
      %c0_19 = arith.constant 0 : index
      %c0_20 = arith.constant 0 : index
      %29 = vector.load %arg7[%c0_19, %c0_20] : memref<32x128xf32, #tpu.memory_space<vmem>>, vector<32x128xf32>
      tpu.vector_store %arg7[%c0_19, %c0_20], %28 {strides = array<i32>} : memref<32x128xf32, #tpu.memory_space<vmem>>, vector<32x128xf32>,
    } else {
    }
    return
  }
  func.func @transform_0(%arg0: i32, %arg1: i32) -> (i32, i32) {
    %c0_i32 = arith.constant 0 : i32
    %c0_i32_0 = arith.constant 0 : i32
    return %arg0, %c0_i32 : i32, i32
  }
  func.func @transform_1(%arg0: i32, %arg1: i32) -> (i32, i32) {
    %c0_i32 = arith.constant 0 : i32
    %c0_i32_0 = arith.constant 0 : i32
    return %c0_i32, %arg1 : i32, i32
  }
  func.func @transform_2(%arg0: i32, %arg1: i32) -> (i32, i32) {
    %c0_i32 = arith.constant 0 : i32
    %c0_i32_0 = arith.constant 0 : i32
    return %c0_i32, %arg1 : i32, i32
  }
  func.func @transform_3(%arg0: i32, %arg1: i32) -> (i32, i32) {
    %c0_i32 = arith.constant 0 : i32
    %c0_i32_0 = arith.constant 0 : i32
    return %arg1, %c0_i32 : i32, i32
  }
  func.func @transform_4(%arg0: i32, %arg1: i32) -> (i32, i32) {
    %c0_i32 = arith.constant 0 : i32
    %c0_i32_0 = arith.constant 0 : i32
    %c0_i32_1 = arith.constant 0 : i32
    return %c0_i32, %c0_i32_0 : i32, i32
  }
  func.func @transform_5(%arg0: i32, %arg1: i32) -> (i32, i32) {
    %c0_i32 = arith.constant 0 : i32
    %c0_i32_0 = arith.constant 0 : i32
    return %arg0, %c0_i32 : i32, i32
  }
}

</mosaic_0001>

<llo_original>
// kernel: tpu_custom_call.1
$region0: #{tpu_custom_call.1}
  #allocation0 [shape = 'u32[]', space=smem, size = 0x4, offset = 0x4, fixed_abs, tag = 'smem constant byte address 0x4 - core index']
  #allocation1 [shape = 'u32[144,128]{1,0:T(1,128)}', space=vmem, size = 0x12000, scoped, tag = 'internal scratch']
  #allocation2 [shape = 'f32[32,128]{1,0:T(8,128)}', space=vmem, size = 0x4000, scoped, tag = 'scratch operand']
  %s0 = inlined_call_operand.hbm [shape: f32[32,128], index: 0, kind: input, shape index: {}]
  %s1 = inlined_call_operand.hbm [shape: f32[128,384], index: 1, kind: input, shape index: {}]
  %s2 = inlined_call_operand.vmem [shape: f32[1,384], index: 2, kind: input, shape index: {}]
  %s3 = inlined_call_operand.hbm [shape: f32[384,128], index: 3, kind: input, shape index: {}]
  %s4 = inlined_call_operand.vmem [shape: f32[1,128], index: 4, kind: input, shape index: {}]
  %s5 = inlined_call_operand.hbm [shape: f32[32,128], index: 5, kind: output, shape index: {}]
  %s6 = sld [smem:[#allocation0]]
  $region77: #{tpu_custom_call.1} parent=0
    _
  %s8 = ssub.s32 1, %s6
  %s9 = scalar_select 0, %s8, %s6
  $region1: #{tpu_custom_call.1} parent=0
    #allocation3 [shape = 'u8[16384]{0}', space=vmem, size = 0x4000, scoped, tag = 'input window, operand 0, single buffered']
    #allocation4 [shape = 's32[2]{0}', space=sflag, size = 0x8, scoped, tag = 'scoped memory for tpu_custom_call.1']
    #allocation5 [shape = 's32[2]{0}', space=sflag, size = 0x8, scoped, tag = 'scoped memory for tpu_custom_call.1']
    #allocation6 [shape = 'u8[131072]{0}', space=vmem, size = 0x20000, scoped, tag = 'input window, operand 1']
    #allocation7 [shape = 's32[2]{0}', space=sflag, size = 0x8, scoped, tag = 'scoped memory for tpu_custom_call.1']
    #allocation8 [shape = 'u8[131072]{0}', space=vmem, size = 0x20000, scoped, tag = 'input window, operand 3']
    #allocation9 [shape = 'u8[16384]{0}', space=vmem, size = 0x4000, scoped, tag = 'output window, operand 0, single buffered']
    %10 = vsyncpa [#allocation4], 0
    %11 = vsyncpa [#allocation7], 0
    %s12 = scalar_lea.sflag [#allocation7], 1
    %13 = vsyncpa %s12, 0
    %14 = vsyncpa [#allocation5], 0
    loop: start=0, step=1, limit=5
    $region2: #{tpu_custom_call.1} parent=1 // loop_pre_header
      _
    $region3: #{tpu_custom_call.1} parent=1 // loop_header
      %s16 = sphi 0, %s20
      %p17 = scmp.ge.s32.totalorder %s16, 5
      %s23 = sphi 0, %s35
      %s24 = sphi 0, %s31
      %s25 = sphi 0, %s23
      %s26 = sphi 0, %s24
      %s27 = sphi 0, %s25
      %s28 = sphi 0, %s26
      %s38 = sphi 0, %s40
      %s41 = sphi 0, %s38
      %s42 = sphi 0, %s41
      %s58 = sphi 0, %s42
      %s64 = sphi 0, %s66
      %s67 = sphi 0, %s64
      %s68 = sphi 0, %s67
      %s84 = sphi 0, %s68
      %s90 = sphi 0, %s92
      %s93 = sphi 0, %s90
      %s94 = sphi 0, %s93
      %s110 = sphi 0, %s94
      %s116 = sphi 0, %s118
      %s119 = sphi 0, %s116
      %s120 = sphi 0, %s119
      %s136 = sphi 0, %s120
      %s140 = sphi 0, %s140
      %s142 = sphi 0, %s140
      %s143 = sphi 0, %s142
      %s157 = sphi 0, %s143
      %s163 = sphi 0, %s165
      %s166 = sphi 0, %s163
      %s167 = sphi 0, %s166
      %s183 = sphi 0, %s167
    $region4: #{tpu_custom_call.1} parent=1 // loop_header_branch
      %19 = sbr.rel (%p17) target = $region8
    $region5: #{tpu_custom_call.1} parent=1 // loop_body
      %s21 = ssub.s32 %s16, 1
      %s22 = ssub.s32 %s16, 2
      %s29 = sadd.s32 1, %s24
      %p30 = scmp.ge.s32.totalorder %s29, 3
      %s31 = scalar_select %p30, 0, %s29
      %s32 = sadd.s32 1, %s23
      %s33 = scalar_select %p30, %s32, %s23
      %p34 = scmp.ge.s32.totalorder %s33, 1
      %s35 = scalar_select %p34, 0, %s33
      %s36 = ssub.s32 %s23, %s35
      %p37 = scmp.eq.s32.totalorder %s36, 0
      %s39 = sadd.s32 %s38, 1
      %s40 = scalar_select %p37, %s38, %s39
      %p43 = pneg %p37
      %p44 = scmp.eq.s32.totalorder %s16, 2
      %p45 = por %p43, %p44
      %p46 = scmp.ne.s32.totalorder %s38, %s41
      %p47 = scmp.eq.s32.totalorder %s16, 0
      %p48 = por %p46, %p47
      %p49 = scmp.ne.s32.totalorder %s38, %s41
      %p50 = scmp.eq.s32.totalorder %s21, 2
      %p51 = por %p49, %p50
      %p52 = scmp.ne.s32.totalorder %s41, %s42
      %p53 = scmp.eq.s32.totalorder %s21, 0
      %p54 = por %p52, %p53
      %p55 = scmp.ne.s32.totalorder %s41, %s42
      %p56 = scmp.eq.s32.totalorder %s22, 2
      %p57 = por %p55, %p56
      %p59 = scmp.ne.s32.totalorder %s42, %s58
      %p60 = scmp.eq.s32.totalorder %s22, 0
      %p61 = por %p59, %p60
      %s62 = ssub.s32 %s24, %s31
      %p63 = scmp.eq.s32.totalorder %s62, 0
      %s65 = sadd.s32 %s64, 1
      %s66 = scalar_select %p63, %s64, %s65
      %p69 = pneg %p63
      %p70 = scmp.eq.s32.totalorder %s16, 2
      %p71 = por %p69, %p70
      %p72 = scmp.ne.s32.totalorder %s64, %s67
      %p73 = scmp.eq.s32.totalorder %s16, 0
      %p74 = por %p72, %p73
      %p75 = scmp.ne.s32.totalorder %s64, %s67
      %p76 = scmp.eq.s32.totalorder %s21, 2
      %p77 = por %p75, %p76
      %p78 = scmp.ne.s32.totalorder %s67, %s68
      %p79 = scmp.eq.s32.totalorder %s21, 0
      %p80 = por %p78, %p79
      %p81 = scmp.ne.s32.totalorder %s67, %s68
      %p82 = scmp.eq.s32.totalorder %s22, 2
      %p83 = por %p81, %p82
      %p85 = scmp.ne.s32.totalorder %s68, %s84
      %p86 = scmp.eq.s32.totalorder %s22, 0
      %p87 = por %p85, %p86
      %s88 = ssub.s32 %s24, %s31
      %p89 = scmp.eq.s32.totalorder %s88, 0
      %s91 = sadd.s32 %s90, 1
      %s92 = scalar_select %p89, %s90, %s91
      %p95 = pneg %p89
      %p96 = scmp.eq.s32.totalorder %s16, 2
      %p97 = por %p95, %p96
      %p98 = scmp.ne.s32.totalorder %s90, %s93
      %p99 = scmp.eq.s32.totalorder %s16, 0
      %p100 = por %p98, %p99
      %p101 = scmp.ne.s32.totalorder %s90, %s93
      %p102 = scmp.eq.s32.totalorder %s21, 2
      %p103 = por %p101, %p102
      %p104 = scmp.ne.s32.totalorder %s93, %s94
      %p105 = scmp.eq.s32.totalorder %s21, 0
      %p106 = por %p104, %p105
      %p107 = scmp.ne.s32.totalorder %s93, %s94
      %p108 = scmp.eq.s32.totalorder %s22, 2
      %p109 = por %p107, %p108
      %p111 = scmp.ne.s32.totalorder %s94, %s110
      %p112 = scmp.eq.s32.totalorder %s22, 0
      %p113 = por %p111, %p112
      %s114 = ssub.s32 %s24, %s31
      %p115 = scmp.eq.s32.totalorder %s114, 0
      %s117 = sadd.s32 %s116, 1
      %s118 = scalar_select %p115, %s116, %s117
      %p121 = pneg %p115
      %p122 = scmp.eq.s32.totalorder %s16, 2
      %p123 = por %p121, %p122
      %p124 = scmp.ne.s32.totalorder %s116, %s119
      %p125 = scmp.eq.s32.totalorder %s16, 0
      %p126 = por %p124, %p125
      %p127 = scmp.ne.s32.totalorder %s116, %s119
      %p128 = scmp.eq.s32.totalorder %s21, 2
      %p129 = por %p127, %p128
      %p130 = scmp.ne.s32.totalorder %s119, %s120
      %p131 = scmp.eq.s32.totalorder %s21, 0
      %p132 = por %p130, %p131
      %p133 = scmp.ne.s32.totalorder %s119, %s120
      %p134 = scmp.eq.s32.totalorder %s22, 2
      %p135 = por %p133, %p134
      %p137 = scmp.ne.s32.totalorder %s120, %s136
      %p138 = scmp.eq.s32.totalorder %s22, 0
      %p139 = por %p137, %p138
      %s141 = sadd.s32 %s140, 1
      %p144 = scmp.eq.s32.totalorder %s16, 2
      %p145 = scmp.ne.s32.totalorder %s140, %s142
      %p146 = scmp.eq.s32.totalorder %s16, 0
      %p147 = por %p145, %p146
      %p148 = scmp.ne.s32.totalorder %s140, %s142
      %p149 = scmp.eq.s32.totalorder %s21, 2
      %p150 = por %p148, %p149
      %p151 = scmp.ne.s32.totalorder %s142, %s143
      %p152 = scmp.eq.s32.totalorder %s21, 0
      %p153 = por %p151, %p152
      %p154 = scmp.ne.s32.totalorder %s142, %s143
      %p155 = scmp.eq.s32.totalorder %s22, 2
      %p156 = por %p154, %p155
      %p158 = scmp.ne.s32.totalorder %s143, %s157
      %p159 = scmp.eq.s32.totalorder %s22, 0
      %p160 = por %p158, %p159
      %s161 = ssub.s32 %s23, %s35
      %p162 = scmp.eq.s32.totalorder %s161, 0
      %s164 = sadd.s32 %s163, 1
      %s165 = scalar_select %p162, %s163, %s164
      %p168 = pneg %p162
      %p169 = scmp.eq.s32.totalorder %s16, 2
      %p170 = por %p168, %p169
      %p171 = scmp.ne.s32.totalorder %s163, %s166
      %p172 = scmp.eq.s32.totalorder %s16, 0
      %p173 = por %p171, %p172
      %p174 = scmp.ne.s32.totalorder %s163, %s166
      %p175 = scmp.eq.s32.totalorder %s21, 2
      %p176 = por %p174, %p175
      %p177 = scmp.ne.s32.totalorder %s166, %s167
      %p178 = scmp.eq.s32.totalorder %s21, 0
      %p179 = por %p177, %p178
      %p180 = scmp.ne.s32.totalorder %s166, %s167
      %p181 = scmp.eq.s32.totalorder %s22, 2
      %p182 = por %p180, %p181
      %p184 = scmp.ne.s32.totalorder %s167, %s183
      %p185 = scmp.eq.s32.totalorder %s22, 0
      %p186 = por %p184, %p185
      %p187 = scmp.le.s32.totalorder 1, %s16
      %p188 = scmp.lt.s32.totalorder %s16, 4
      %p189 = pnand %p187, %p188
      %p190 = pneg %p189
      // Predicated region
      $region9: #{tpu_custom_call.1} parent=5 // pred_check
        _
      $region10: #{tpu_custom_call.1} parent=5 // pred_check_branch
        %192 = sbr.rel (%p189) target = $region12
      $region11: #{tpu_custom_call.1} parent=5 // pred_region
        %s193 = ssub.s32 %s16, 1
        // Predicated region
        $region13: #{tpu_custom_call.1} parent=11 // pred_check
          %p194 = pneg %p54
        $region14: #{tpu_custom_call.1} parent=11 // pred_check_branch
          %196 = sbr.rel (%p194) target = $region16
        $region15: #{tpu_custom_call.1} parent=11 // pred_region
          %s197 = smul.u32 4, %s25
          %s199 = ssub.s32 512, 512
          %200 = vsyncadd [#allocation4], %s199
          %s201 = smul.addr %s197, 128
          %s202 = scalar_lea.hbm %s0, %s201
          %s203 = sshll.u32 [#allocation3], 4
          %s204 = int_to_ptr.vmem [resolvable:$true] %s203
          %209 = dma.hbm_to_vmem [thread:$0]  %s202, 512, %s204, [#allocation4], 128, 128, 8
        $region16: #{tpu_custom_call.1} parent=11 // pred_fallthru
          _
        // Predicated region
        $region17: #{tpu_custom_call.1} parent=11 // pred_check
          %p210 = pneg %p153
        $region18: #{tpu_custom_call.1} parent=11 // pred_check_branch
          %212 = sbr.rel (%p210) target = $region20
        $region19: #{tpu_custom_call.1} parent=11 // pred_region
          _
        $region20: #{tpu_custom_call.1} parent=11 // pred_fallthru
          _
      $region12: #{tpu_custom_call.1} parent=5 // pred_fallthru
        _
      %p213 = scmp.lt.s32.totalorder %s16, 3
      // Predicated region
      $region21: #{tpu_custom_call.1} parent=5 // pred_check
        %p214 = pneg %p213
      $region22: #{tpu_custom_call.1} parent=5 // pred_check_branch
        %216 = sbr.rel (%p214) target = $region24
      $region23: #{tpu_custom_call.1} parent=5 // pred_region
        // Predicated region
        $region25: #{tpu_custom_call.1} parent=23 // pred_check
          %p217 = pneg %p74
        $region26: #{tpu_custom_call.1} parent=23 // pred_check_branch
          %219 = sbr.rel (%p217) target = $region28
        $region27: #{tpu_custom_call.1} parent=23 // pred_region
          %s220 = sand.u32 %s16, 1
          %s221 = scalar_lea.sflag [#allocation7], %s220
          %s222 = sand.u32 %s64, 1
          %s223 = smul.addr %s222, 128
          %s224 = scalar_lea.vmem [#allocation6], %s223
          %s226 = ssub.s32 2048, 2048
          %227 = vsyncadd %s221, %s226
          %s228 = smul.addr %s24, 128
          %s229 = scalar_lea.hbm %s1, %s228
          %s230 = sshll.u32 %s224, 4
          %s231 = int_to_ptr.vmem [resolvable:$true] %s230
          %236 = dma.hbm_to_vmem [thread:$0]  %s229, 2048, %s231, %s221, 384, 128, 8
        $region28: #{tpu_custom_call.1} parent=23 // pred_fallthru
          _
        // Predicated region
        $region29: #{tpu_custom_call.1} parent=23 // pred_check
          %p237 = pneg %p100
        $region30: #{tpu_custom_call.1} parent=23 // pred_check_branch
          %239 = sbr.rel (%p237) target = $region32
        $region31: #{tpu_custom_call.1} parent=23 // pred_region
          %p240 = scmp.lt.s32.totalorder %s24, 2
          %s241 = scalar_select %p240, %s24, 2
          %s242 = scalar_lea.vmem %s2, %s241
        $region32: #{tpu_custom_call.1} parent=23 // pred_fallthru
          _
        // Predicated region
        $region33: #{tpu_custom_call.1} parent=23 // pred_check
          %p243 = pneg %p126
        $region34: #{tpu_custom_call.1} parent=23 // pred_check_branch
          %245 = sbr.rel (%p243) target = $region36
        $region35: #{tpu_custom_call.1} parent=23 // pred_region
          %s246 = sand.u32 %s16, 1
          %s247 = scalar_lea.sflag [#allocation7], %s246
          %s248 = sand.u32 %s116, 1
          %s249 = smul.addr %s248, 128
          %s250 = scalar_lea.vmem [#allocation8], %s249
          %s251 = smul.u32 16, %s24
          %s253 = ssub.s32 2048, 2048
          %254 = vsyncadd %s247, %s253
          %s255 = smul.addr %s251, 128
          %s256 = scalar_lea.hbm %s3, %s255
          %s257 = sshll.u32 %s250, 4
          %s258 = int_to_ptr.vmem [resolvable:$true] %s257
          %263 = dma.hbm_to_vmem [thread:$0]  %s256, 2048, %s258, %s247, 128, 128, 8
        $region36: #{tpu_custom_call.1} parent=23 // pred_fallthru
          _
      $region24: #{tpu_custom_call.1} parent=5 // pred_fallthru
        _
      %p264 = scmp.le.s32.totalorder 1, %s16
      %p265 = scmp.lt.s32.totalorder %s16, 4
      %p266 = pnand %p264, %p265
      %p267 = pneg %p266
      // Predicated region
      $region37: #{tpu_custom_call.1} parent=5 // pred_check
        _
      $region38: #{tpu_custom_call.1} parent=5 // pred_check_branch
        %269 = sbr.rel (%p266) target = $region40
      $region39: #{tpu_custom_call.1} parent=5 // pred_region
        %s270 = ssub.s32 %s16, 1
        // Predicated region
        $region41: #{tpu_custom_call.1} parent=39 // pred_check
          %p271 = pneg %p54
        $region42: #{tpu_custom_call.1} parent=39 // pred_check_branch
          %273 = sbr.rel (%p271) target = $region44
        $region43: #{tpu_custom_call.1} parent=39 // pred_region
          %274 = dma.done [#allocation4], 512
        $region44: #{tpu_custom_call.1} parent=39 // pred_fallthru
          _
        %s275 = sand.u32 %s21, 1
        %s276 = scalar_lea.sflag [#allocation7], %s275
        %s277 = sand.u32 %s67, 1
        %s278 = smul.addr %s277, 128
        %s279 = scalar_lea.vmem [#allocation6], %s278
        // Predicated region
        $region45: #{tpu_custom_call.1} parent=39 // pred_check
          %p280 = pneg %p80
        $region46: #{tpu_custom_call.1} parent=39 // pred_check_branch
          %282 = sbr.rel (%p280) target = $region48
        $region47: #{tpu_custom_call.1} parent=39 // pred_region
          %283 = dma.done %s276, 2048
        $region48: #{tpu_custom_call.1} parent=39 // pred_fallthru
          _
        %s284 = sand.u32 %s21, 1
        %s285 = scalar_lea.sflag [#allocation7], %s284
        %s286 = sand.u32 %s119, 1
        %s287 = smul.addr %s286, 128
        %s288 = scalar_lea.vmem [#allocation8], %s287
        // Predicated region
        $region49: #{tpu_custom_call.1} parent=39 // pred_check
          %p289 = pneg %p132
        $region50: #{tpu_custom_call.1} parent=39 // pred_check_branch
          %291 = sbr.rel (%p289) target = $region52
        $region51: #{tpu_custom_call.1} parent=39 // pred_region
          %292 = dma.done %s285, 2048
        $region52: #{tpu_custom_call.1} parent=39 // pred_fallthru
          _
        %p293 = pneg %p54
        %p294 = pneg %p51
        %s295 = sand.u32 %s21, 1
        %s296 = scalar_lea.sflag [#allocation7], %s295
        %s297 = sand.u32 %s67, 1
        %s298 = smul.addr %s297, 128
        %s299 = scalar_lea.vmem [#allocation6], %s298
        %p300 = pneg %p80
        %p301 = pneg %p77
        %p302 = scmp.lt.s32.totalorder %s26, 2
        %s303 = scalar_select %p302, %s26, 2
        %s304 = scalar_lea.vmem %s2, %s303
        %p305 = pneg %p106
        %p306 = pneg %p103
        %s307 = sand.u32 %s21, 1
        %s308 = scalar_lea.sflag [#allocation7], %s307
        %s309 = sand.u32 %s119, 1
        %s310 = smul.addr %s309, 128
        %s311 = scalar_lea.vmem [#allocation8], %s310
        %p312 = pneg %p132
        %p313 = pneg %p129
        %p314 = pneg %p153
        %p315 = pneg %p150
        %p316 = pneg %p179
        %p317 = pneg %p176
        %s318 = smul.u32 4, %s25
        %p319 = scmp.lt.s32.totalorder %s26, 2
        %s320 = scalar_select %p319, %s26, 2
        %s321 = scalar_lea.vmem %s2, %s320
        %s322 = smul.u32 16, %s26
        %s323 = smul.u32 4, %s25
        %v324 = vld [vmem:[#allocation3] sm:$0xff]
        %v325 = vld [vmem:[#allocation3 + $0x8] sm:$0xff]
        %v326 = vld [vmem:[#allocation3 + $0x10] sm:$0xff]
        %v327 = vld [vmem:[#allocation3 + $0x18] sm:$0xff]
        %v328 = vld [vmem:[%s279] sm:$0xff]
        %v329 = vld [vmem:[%s279 + $0x8] sm:$0xff]
        %v330 = vld [vmem:[%s279 + $0x10] sm:$0xff]
        %v331 = vld [vmem:[%s279 + $0x18] sm:$0xff]
        %v332 = vld [vmem:[%s279 + $0x20] sm:$0xff]
        %v333 = vld [vmem:[%s279 + $0x28] sm:$0xff]
        %v334 = vld [vmem:[%s279 + $0x30] sm:$0xff]
        %v335 = vld [vmem:[%s279 + $0x38] sm:$0xff]
        %v336 = vld [vmem:[%s279 + $0x40] sm:$0xff]
        %v337 = vld [vmem:[%s279 + $0x48] sm:$0xff]
        %v338 = vld [vmem:[%s279 + $0x50] sm:$0xff]
        %v339 = vld [vmem:[%s279 + $0x58] sm:$0xff]
        %v340 = vld [vmem:[%s279 + $0x60] sm:$0xff]
        %v341 = vld [vmem:[%s279 + $0x68] sm:$0xff]
        %v342 = vld [vmem:[%s279 + $0x70] sm:$0xff]
        %v343 = vld [vmem:[%s279 + $0x78] sm:$0xff]
        %v344 = vld [vmem:[%s321] sm:$0x1]
        %v346 = vlaneseq
        %v347 = vshrl.u32 %v346, 7
        %v348 = vsub.s32 0, %v347
        %v349 = vrot.slane %v344, %v348
        %351 = vmatprep.subr.mxu0 0.0
        %352 = vmatpush1.msra.mxu0 %v328
        %353 = vmatprep.subr.mxu0 0.0
        %354 = vmatpush1.msra.mxu0 %v329
        %355 = vmatprep.subr.mxu0 0.0
        %356 = vmatpush1.msra.mxu0 %v330
        %357 = vmatprep.subr.mxu0 0.0
        %358 = vmatpush1.msra.mxu0 %v331
        %359 = vmatprep.subr.mxu0 0.0
        %360 = vmatpush1.msra.mxu0 %v332
        %361 = vmatprep.subr.mxu0 0.0
        %362 = vmatpush1.msra.mxu0 %v333
        %363 = vmatprep.subr.mxu0 0.0
        %364 = vmatpush1.msra.mxu0 %v334
        %365 = vmatprep.subr.mxu0 0.0
        %366 = vmatpush1.msra.mxu0 %v335
        %367 = vmatprep.subr.mxu0 0.0
        %368 = vmatpush1.msra.mxu0 %v336
        %369 = vmatprep.subr.mxu0 0.0
        %370 = vmatpush1.msra.mxu0 %v337
        %371 = vmatprep.subr.mxu0 0.0
        %372 = vmatpush1.msra.mxu0 %v338
        %373 = vmatprep.subr.mxu0 0.0
        %374 = vmatpush1.msra.mxu0 %v339
        %375 = vmatprep.subr.mxu0 0.0
        %376 = vmatpush1.msra.mxu0 %v340
        %377 = vmatprep.subr.mxu0 0.0
        %378 = vmatpush1.msra.mxu0 %v341
        %379 = vmatprep.subr.mxu0 0.0
        %380 = vmatpush1.msra.mxu0 %v342
        %381 = vmatprep.subr.mxu0 0.0
        %382 = vmatpush1.msra.mxu0 %v343
        %383 = vmatprep.subr.mxu0 0.0
        %384 = vmatpush1.msra.mxu0 0.0
        %385 = vmatprep.subr.mxu0 0.0
        %386 = vmatpush1.msra.mxu0 0.0
        %387 = vmatprep.subr.mxu0 0.0
        %388 = vmatpush1.msra.mxu0 0.0
        %389 = vmatprep.subr.mxu0 0.0
        %390 = vmatpush1.msra.mxu0 0.0
        %391 = vmatprep.subr.mxu0 0.0
        %392 = vmatpush1.msra.mxu0 0.0
        %393 = vmatprep.subr.mxu0 0.0
        %394 = vmatpush1.msra.mxu0 0.0
        %395 = vmatprep.subr.mxu0 0.0
        %396 = vmatpush1.msra.mxu0 0.0
        %397 = vmatprep.subr.mxu0 0.0
        %398 = vmatpush1.msra.mxu0 0.0
        %399 = vmatprep.subr.mxu0 0.0
        %400 = vmatpush1.msra.mxu0 0.0
        %401 = vmatprep.subr.mxu0 0.0
        %402 = vmatpush1.msra.mxu0 0.0
        %403 = vmatprep.subr.mxu0 0.0
        %404 = vmatpush1.msra.mxu0 0.0
        %405 = vmatprep.subr.mxu0 0.0
        %406 = vmatpush1.msra.mxu0 0.0
        %407 = vmatprep.subr.mxu0 0.0
        %408 = vmatpush1.msra.mxu0 0.0
        %409 = vmatprep.subr.mxu0 0.0
        %410 = vmatpush1.msra.mxu0 0.0
        %411 = vmatprep.subr.mxu0 0.0
        %412 = vmatpush1.msra.mxu0 0.0
        %413 = vmatprep.subr.mxu0 0.0
        %414 = vmatpush1.msra.mxu0 0.0
        %415 = vmatprep.mubr.f32.mxu0 0.0
        %416 = vmatmul.mubr.f32.gmra.mrb[0].mxu0 %v324
        %v417 = vpop.f32.mrb[0].mxu0
        %v418 = vadd.f32 %v349, %v417
        %v419 = vpop.f32.mrb[0].mxu0
        %420 = vmatprep.mubr.f32.mxu0 0.0
        %421 = vmatmul.mubr.f32.gmra.mrb[0].mxu0 %v325
        %v422 = vpop.f32.mrb[0].mxu0
        %v423 = vadd.f32 %v349, %v422
        %v424 = vpop.f32.mrb[0].mxu0
        %425 = vmatprep.mubr.f32.mxu0 0.0
        %426 = vmatmul.mubr.f32.gmra.mrb[0].mxu0 %v326
        %v427 = vpop.f32.mrb[0].mxu0
        %v428 = vadd.f32 %v349, %v427
        %v429 = vpop.f32.mrb[0].mxu0
        %430 = vmatprep.mubr.f32.mxu0 0.0
        %431 = vmatmul.mubr.f32.gmra.mrb[0].mxu0 %v327
        %v432 = vpop.f32.mrb[0].mxu0
        %v433 = vadd.f32 %v349, %v432
        %v434 = vpop.f32.mrb[0].mxu0
        %435 = vdwg.mxu0
        %v436 = vmul.f32 %v418, 0.5
        %v437 = vmul.f32 %v423, 0.5
        %v438 = vmul.f32 %v428, 0.5
        %v439 = vmul.f32 %v433, 0.5
        %v440 = vmul.f32 %v418, 0.70710677
        %v441 = vmul.f32 %v423, 0.70710677
        %v442 = vmul.f32 %v428, 0.70710677
        %v443 = vmul.f32 %v433, 0.70710677
        %v444 = verf.f32.pop %v440
        %v445 = verf.f32.pop %v441
        %v446 = verf.f32.pop %v442
        %v447 = verf.f32.pop %v443
        %v448 = vadd.f32 %v444, 1.0
        %v449 = vadd.f32 %v445, 1.0
        %v450 = vadd.f32 %v446, 1.0
        %v451 = vadd.f32 %v447, 1.0
        %v452 = vmul.f32 %v436, %v448
        %v453 = vmul.f32 %v437, %v449
        %v454 = vmul.f32 %v438, %v450
        %v455 = vmul.f32 %v439, %v451
        %v456 = vld [vmem:[%s288] sm:$0xff]
        %v457 = vld [vmem:[%s288 + $0x8] sm:$0xff]
        %v458 = vld [vmem:[%s288 + $0x10] sm:$0xff]
        %v459 = vld [vmem:[%s288 + $0x18] sm:$0xff]
        %v460 = vld [vmem:[%s288 + $0x20] sm:$0xff]
        %v461 = vld [vmem:[%s288 + $0x28] sm:$0xff]
        %v462 = vld [vmem:[%s288 + $0x30] sm:$0xff]
        %v463 = vld [vmem:[%s288 + $0x38] sm:$0xff]
        %v464 = vld [vmem:[%s288 + $0x40] sm:$0xff]
        %v465 = vld [vmem:[%s288 + $0x48] sm:$0xff]
        %v466 = vld [vmem:[%s288 + $0x50] sm:$0xff]
        %v467 = vld [vmem:[%s288 + $0x58] sm:$0xff]
        %v468 = vld [vmem:[%s288 + $0x60] sm:$0xff]
        %v469 = vld [vmem:[%s288 + $0x68] sm:$0xff]
        %v470 = vld [vmem:[%s288 + $0x70] sm:$0xff]
        %v471 = vld [vmem:[%s288 + $0x78] sm:$0xff]
        %472 = vmatprep.subr.mxu0 0.0
        %473 = vmatpush1.msra.mxu0 %v456
        %474 = vmatprep.subr.mxu0 0.0
        %475 = vmatpush1.msra.mxu0 %v457
        %476 = vmatprep.subr.mxu0 0.0
        %477 = vmatpush1.msra.mxu0 %v458
        %478 = vmatprep.subr.mxu0 0.0
        %479 = vmatpush1.msra.mxu0 %v459
        %480 = vmatprep.subr.mxu0 0.0
        %481 = vmatpush1.msra.mxu0 %v460
        %482 = vmatprep.subr.mxu0 0.0
        %483 = vmatpush1.msra.mxu0 %v461
        %484 = vmatprep.subr.mxu0 0.0
        %485 = vmatpush1.msra.mxu0 %v462
        %486 = vmatprep.subr.mxu0 0.0
        %487 = vmatpush1.msra.mxu0 %v463
        %488 = vmatprep.subr.mxu0 0.0
        %489 = vmatpush1.msra.mxu0 %v464
        %490 = vmatprep.subr.mxu0 0.0
        %491 = vmatpush1.msra.mxu0 %v465
        %492 = vmatprep.subr.mxu0 0.0
        %493 = vmatpush1.msra.mxu0 %v466
        %494 = vmatprep.subr.mxu0 0.0
        %495 = vmatpush1.msra.mxu0 %v467
        %496 = vmatprep.subr.mxu0 0.0
        %497 = vmatpush1.msra.mxu0 %v468
        %498 = vmatprep.subr.mxu0 0.0
        %499 = vmatpush1.msra.mxu0 %v469
        %500 = vmatprep.subr.mxu0 0.0
        %501 = vmatpush1.msra.mxu0 %v470
        %502 = vmatprep.subr.mxu0 0.0
        %503 = vmatpush1.msra.mxu0 %v471
        %504 = vmatprep.subr.mxu0 0.0
        %505 = vmatpush1.msra.mxu0 0.0
        %506 = vmatprep.subr.mxu0 0.0
        %507 = vmatpush1.msra.mxu0 0.0
        %508 = vmatprep.subr.mxu0 0.0
        %509 = vmatpush1.msra.mxu0 0.0
        %510 = vmatprep.subr.mxu0 0.0
        %511 = vmatpush1.msra.mxu0 0.0
        %512 = vmatprep.subr.mxu0 0.0
        %513 = vmatpush1.msra.mxu0 0.0
        %514 = vmatprep.subr.mxu0 0.0
        %515 = vmatpush1.msra.mxu0 0.0
        %516 = vmatprep.subr.mxu0 0.0
        %517 = vmatpush1.msra.mxu0 0.0
        %518 = vmatprep.subr.mxu0 0.0
        %519 = vmatpush1.msra.mxu0 0.0
        %520 = vmatprep.subr.mxu0 0.0
        %521 = vmatpush1.msra.mxu0 0.0
        %522 = vmatprep.subr.mxu0 0.0
        %523 = vmatpush1.msra.mxu0 0.0
        %524 = vmatprep.subr.mxu0 0.0
        %525 = vmatpush1.msra.mxu0 0.0
        %526 = vmatprep.subr.mxu0 0.0
        %527 = vmatpush1.msra.mxu0 0.0
        %528 = vmatprep.subr.mxu0 0.0
        %529 = vmatpush1.msra.mxu0 0.0
        %530 = vmatprep.subr.mxu0 0.0
        %531 = vmatpush1.msra.mxu0 0.0
        %532 = vmatprep.subr.mxu0 0.0
        %533 = vmatpush1.msra.mxu0 0.0
        %534 = vmatprep.subr.mxu0 0.0
        %535 = vmatpush1.msra.mxu0 0.0
        %536 = vmatprep.mubr.f32.mxu0 0.0
        %537 = vmatmul.mubr.f32.gmra.mrb[0].mxu0 %v452
        %v538 = vpop.f32.mrb[0].mxu0
        %v539 = vadd.f32 0.0, %v538
        %v540 = vpop.f32.mrb[0].mxu0
        %541 = vmatprep.mubr.f32.mxu0 0.0
        %542 = vmatmul.mubr.f32.gmra.mrb[0].mxu0 %v453
        %v543 = vpop.f32.mrb[0].mxu0
        %v544 = vadd.f32 0.0, %v543
        %v545 = vpop.f32.mrb[0].mxu0
        %546 = vmatprep.mubr.f32.mxu0 0.0
        %547 = vmatmul.mubr.f32.gmra.mrb[0].mxu0 %v454
        %v548 = vpop.f32.mrb[0].mxu0
        %v549 = vadd.f32 0.0, %v548
        %v550 = vpop.f32.mrb[0].mxu0
        %551 = vmatprep.mubr.f32.mxu0 0.0
        %552 = vmatmul.mubr.f32.gmra.mrb[0].mxu0 %v455
        %v553 = vpop.f32.mrb[0].mxu0
        %v554 = vadd.f32 0.0, %v553
        %v555 = vpop.f32.mrb[0].mxu0
        %556 = vdwg.mxu0
        %p557 = scmp.eq.s32.totalorder %s26, 0
        // Predicated region
        $region53: #{tpu_custom_call.1} parent=39 // pred_check
          %p558 = pneg %p557
        $region54: #{tpu_custom_call.1} parent=39 // pred_check_branch
          %560 = sbr.rel (%p558) target = $region56
        $region55: #{tpu_custom_call.1} parent=39 // pred_region
          %561 = vst [vmem:[#allocation2] sm:$0xff] %v539
          %562 = vst [vmem:[#allocation2 + $0x8] sm:$0xff] %v544
          %563 = vst [vmem:[#allocation2 + $0x10] sm:$0xff] %v549
          %564 = vst [vmem:[#allocation2 + $0x18] sm:$0xff] %v554
        $region56: #{tpu_custom_call.1} parent=39 // pred_fallthru
          _
        %p565 = scmp.gt.s32.totalorder %s26, 0
        // Predicated region
        $region57: #{tpu_custom_call.1} parent=39 // pred_check
          %p566 = pneg %p565
        $region58: #{tpu_custom_call.1} parent=39 // pred_check_branch
          %568 = sbr.rel (%p566) target = $region60
        $region59: #{tpu_custom_call.1} parent=39 // pred_region
          %v569 = vld [vmem:[#allocation2] sm:$0xff]
          %v570 = vld [vmem:[#allocation2 + $0x8] sm:$0xff]
          %v571 = vld [vmem:[#allocation2 + $0x10] sm:$0xff]
          %v572 = vld [vmem:[#allocation2 + $0x18] sm:$0xff]
          %v573 = vadd.f32 %v569, %v539
          %v574 = vadd.f32 %v570, %v544
          %v575 = vadd.f32 %v571, %v549
          %v576 = vadd.f32 %v572, %v554
          %577 = vst [vmem:[#allocation2] sm:$0xff] %v573
          %578 = vst [vmem:[#allocation2 + $0x8] sm:$0xff] %v574
          %579 = vst [vmem:[#allocation2 + $0x10] sm:$0xff] %v575
          %580 = vst [vmem:[#allocation2 + $0x18] sm:$0xff] %v576
        $region60: #{tpu_custom_call.1} parent=39 // pred_fallthru
          _
        %p581 = scmp.eq.s32.totalorder %s26, 2
        // Predicated region
        $region61: #{tpu_custom_call.1} parent=39 // pred_check
          %p582 = pneg %p581
        $region62: #{tpu_custom_call.1} parent=39 // pred_check_branch
          %584 = sbr.rel (%p582) target = $region64
        $region63: #{tpu_custom_call.1} parent=39 // pred_region
          %v585 = vld [vmem:[#allocation2] sm:$0xff]
          %v586 = vld [vmem:[#allocation2 + $0x8] sm:$0xff]
          %v587 = vld [vmem:[#allocation2 + $0x10] sm:$0xff]
          %v588 = vld [vmem:[#allocation2 + $0x18] sm:$0xff]
          %v589 = vld [vmem:[%s4] sm:$0x1]
          %v591 = vlaneseq
          %v592 = vshrl.u32 %v591, 7
          %v593 = vsub.s32 0, %v592
          %v594 = vrot.slane %v589, %v593
          %v596 = vadd.f32 %v585, %v594
          %v597 = vadd.f32 %v586, %v594
          %v598 = vadd.f32 %v587, %v594
          %v599 = vadd.f32 %v588, %v594
          %600 = vst [vmem:[#allocation9] sm:$0xff] %v596
          %601 = vst [vmem:[#allocation9 + $0x8] sm:$0xff] %v597
          %602 = vst [vmem:[#allocation9 + $0x10] sm:$0xff] %v598
          %603 = vst [vmem:[#allocation9 + $0x18] sm:$0xff] %v599
        $region64: #{tpu_custom_call.1} parent=39 // pred_fallthru
          _
        // Predicated region
        $region65: #{tpu_custom_call.1} parent=39 // pred_check
          %p604 = pneg %p176
        $region66: #{tpu_custom_call.1} parent=39 // pred_check_branch
          %606 = sbr.rel (%p604) target = $region68
        $region67: #{tpu_custom_call.1} parent=39 // pred_region
          %s607 = smul.u32 4, %s25
          %s609 = ssub.s32 512, 512
          %610 = vsyncadd [#allocation5], %s609
          %s611 = smul.addr %s607, 128
          %s612 = scalar_lea.hbm %s5, %s611
          %s613 = sshll.u32 [#allocation9], 4
          %s614 = int_to_ptr.vmem [resolvable:$true] %s613
          %619 = dma.vmem_to_hbm [thread:$0]  %s614, 512, %s612, [#allocation5], 128, 128, 8
        $region68: #{tpu_custom_call.1} parent=39 // pred_fallthru
          _
        // Predicated region
        $region69: #{tpu_custom_call.1} parent=39 // pred_check
          %p620 = pneg %p176
        $region70: #{tpu_custom_call.1} parent=39 // pred_check_branch
          %622 = sbr.rel (%p620) target = $region72
        $region71: #{tpu_custom_call.1} parent=39 // pred_region
          %623 = dma.done [#allocation5], 512
        $region72: #{tpu_custom_call.1} parent=39 // pred_fallthru
          _
      $region40: #{tpu_custom_call.1} parent=5 // pred_fallthru
        _
      %p624 = scmp.le.s32.totalorder 2, %s16
      // Predicated region
      $region73: #{tpu_custom_call.1} parent=5 // pred_check
        %p625 = pneg %p624
      $region74: #{tpu_custom_call.1} parent=5 // pred_check_branch
        %627 = sbr.rel (%p625) target = $region76
      $region75: #{tpu_custom_call.1} parent=5 // pred_region
        %s628 = ssub.s32 %s16, 2
      $region76: #{tpu_custom_call.1} parent=5 // pred_fallthru
        _
    $region6: #{tpu_custom_call.1} parent=1 // loop_footer
      %s20 = sadd.s32 1, %s16
    $region7: #{tpu_custom_call.1} parent=1 // loop_footer_branch
      %15 = sbr.rel target = $region3
    $region8: #{tpu_custom_call.1} parent=1 // loop_exit
      _
    %629 = vsyncpa [#allocation4], 1
    %s630 = scalar_lea.sflag [#allocation4], 1
    %631 = vsyncpa %s630, 1
    %632 = vsyncpa [#allocation7], 1
    %s633 = scalar_lea.sflag [#allocation7], 1
    %634 = vsyncpa %s633, 1
    %635 = vsyncpa [#allocation5], 1
    %s636 = scalar_lea.sflag [#allocation5], 1
    %637 = vsyncpa %s636, 1

</llo_original>
